<compile_context>
chip_gen: v5e
topology: v5e:2x2
jax: 0.10.0
libtpu: 0.0.40
codegen_flags: <defaults>
</compile_context>

<pallas_src>
import functools
import math

import jax
import jax.numpy as jnp
from jax.experimental import pallas as pl
from jax.experimental.pallas import tpu as pltpu


# --------------------------------------------------------------------------
# In-kernel helpers
# --------------------------------------------------------------------------

def _layernorm(z, g, b, eps=1e-5):
    mu = jnp.mean(z, axis=-1, keepdims=True)
    var = jnp.mean((z - mu) ** 2, axis=-1, keepdims=True)
    return (z - mu) * jax.lax.rsqrt(var + eps) * g + b


def _attn_core(x_res, q, k, v, wo, bo, g, beta, *, num_heads, causal):
    """Per-head attention + fused out-proj + residual + LayerNorm, all in VMEM.

    x_res,q:(Sq,D)  k,v:(Sk,D)  wo:(D,D)  bo,g,beta:(1,D) -> (Sq,D)
    """
    Sq, D = q.shape
    Sk = k.shape[0]
    Dh = D // num_heads

    # Fold the 1/sqrt(Dh) scale into Q (touches Sq*D elems, not Sq*Sk).
    q = q * (1.0 / math.sqrt(Dh))

    if causal:
        row = jax.lax.broadcasted_iota(jnp.int32, (Sq, Sk), 0)
        col = jax.lax.broadcasted_iota(jnp.int32, (Sq, Sk), 1)
        bias = jnp.where(row >= col, 0.0, -1e30).astype(jnp.float32)
    else:
        bias = None

    # Out-projection folded into the head loop:
    #   concat_h(ctx_h) @ Wo  ==  Σ_h ctx_h @ Wo[h*Dh:(h+1)*Dh, :]
    out = jnp.zeros((Sq, D), jnp.float32)
    for h in range(num_heads):            # static unroll; heads split in VMEM
        sl = slice(h * Dh, (h + 1) * Dh)
        qh, kh, vh = q[:, sl], k[:, sl], v[:, sl]
        # contract last dims directly -> no k.T / XLU transpose
        s = jax.lax.dot_general(qh, kh, (((1,), (1,)), ((), ())),
                                preferred_element_type=jnp.float32)
        if bias is not None:
            s = s + bias
        m = jnp.max(s, axis=-1, keepdims=True)
        e = jnp.exp(s - m)
        denom = jnp.sum(e, axis=-1, keepdims=True)
        p = e * pl.reciprocal(denom, approx=True)
        ctx_h = jnp.dot(p, vh, preferred_element_type=jnp.float32)  # (Sq, Dh)
        out += jnp.dot(ctx_h, wo[sl, :], preferred_element_type=jnp.float32)

    out = out + bo
    return _layernorm(x_res + out, g, beta)


# --------------------------------------------------------------------------
# Pallas kernels
# --------------------------------------------------------------------------

def _self_attn_block_kernel(x_ref, wqkv_ref, bqkv_ref, wo_ref, bo_ref,
                            g_ref, b_ref, o_ref, *, num_heads, causal):
    """One batch: LayerNorm(x + OutProj(MHA(x))).  x:(1,S,D) wqkv:(D,3D)."""
    x = x_ref[0].astype(jnp.float32)                        # (S, D)
    D = x.shape[-1]
    qkv = (jnp.dot(x, wqkv_ref[...], preferred_element_type=jnp.float32)
           + bqkv_ref[...])                                  # (S, 3D)
    q, k, v = qkv[:, :D], qkv[:, D:2 * D], qkv[:, 2 * D:]
    o_ref[0] = _attn_core(x, q, k, v, wo_ref[...], bo_ref[...],
                          g_ref[...], b_ref[...],
                          num_heads=num_heads, causal=causal)


def _cross_attn_block_kernel(xq_ref, xkv_ref, wq_ref, bq_ref, wkv_ref, bkv_ref,
                             wo_ref, bo_ref, g_ref, b_ref, o_ref, *, num_heads):
    """One batch: LayerNorm(xq + OutProj(MHA(xq, xkv, xkv)))."""
    xq = xq_ref[0].astype(jnp.float32)                       # (Sq, D)
    xkv = xkv_ref[0].astype(jnp.float32)                     # (Sk, D)
    D = xq.shape[-1]
    q = jnp.dot(xq, wq_ref[...], preferred_element_type=jnp.float32) + bq_ref[...]
    kv = (jnp.dot(xkv, wkv_ref[...], preferred_element_type=jnp.float32)
          + bkv_ref[...])                                    # (Sk, 2D)
    k, v = kv[:, :D], kv[:, D:]
    o_ref[0] = _attn_core(xq, q, k, v, wo_ref[...], bo_ref[...],
                          g_ref[...], b_ref[...],
                          num_heads=num_heads, causal=False)


def _ffn_block_kernel(x_ref, w1_ref, b1_ref, w2_ref, b2_ref, g_ref, b_ref,
                      o_ref):
    """One batch: LayerNorm(x + W2(ReLU(W1 x))).  x:(1,S,D)."""
    x = x_ref[0].astype(jnp.float32)
    h = jnp.maximum(
        jnp.dot(x, w1_ref[...], preferred_element_type=jnp.float32)
        + b1_ref[...], 0.0)
    y = jnp.dot(h, w2_ref[...], preferred_element_type=jnp.float32) + b2_ref[...]
    o_ref[0] = _layernorm(x + y, g_ref[...], b_ref[...])


def _tiled_linear_kernel(x_ref, w_ref, b_ref, o_ref, acc_ref):
    """out = x @ w + b, tiled over (M, N, K) with f32 VMEM accumulator."""
    k = pl.program_id(2)

    @pl.when(k == 0)
    def _():
        acc_ref[...] = jnp.zeros_like(acc_ref)

    acc_ref[...] += jnp.dot(x_ref[...], w_ref[...],
                            preferred_element_type=jnp.float32)

    @pl.when(k == pl.num_programs(2) - 1)
    def _():
        o_ref[...] = (acc_ref[...] + b_ref[...]).astype(o_ref.dtype)


# --------------------------------------------------------------------------
# Pallas wrappers
# --------------------------------------------------------------------------

def _full_spec(shape):
    """BlockSpec covering a whole (grid-invariant) array."""
    nd = len(shape)
    return pl.BlockSpec(shape, lambda b, _nd=nd: (0,) * _nd)


def pallas_self_attn_block(x, wqkv, bqkv, wo, bo, ln_g, ln_b,
                           num_heads, causal):
    B, S, D = x.shape
    kern = functools.partial(_self_attn_block_kernel,
                             num_heads=num_heads, causal=causal)
    return pl.pallas_call(
        kern,
        out_shape=jax.ShapeDtypeStruct((B, S, D), jnp.float32),
        grid=(B,),
        in_specs=[
            pl.BlockSpec((1, S, D), lambda b: (b, 0, 0)),
            _full_spec((D, 3 * D)),
            _full_spec((1, 3 * D)),
            _full_spec((D, D)),
            _full_spec((1, D)),
            _full_spec((1, D)),
            _full_spec((1, D)),
        ],
        out_specs=pl.BlockSpec((1, S, D), lambda b: (b, 0, 0)),
        compiler_params=pltpu.CompilerParams(
            dimension_semantics=("parallel",)),
    )(x, wqkv, bqkv.reshape(1, 3 * D), wo, bo.reshape(1, D),
      ln_g.reshape(1, D), ln_b.reshape(1, D))


def pallas_cross_attn_block(xq, xkv, wq, bq, wkv, bkv, wo, bo, ln_g, ln_b,
                            num_heads):
    B, Sq, D = xq.shape
    Sk = xkv.shape[1]
    kern = functools.partial(_cross_attn_block_kernel, num_heads=num_heads)
    return pl.pallas_call(
        kern,
        out_shape=jax.ShapeDtypeStruct((B, Sq, D), jnp.float32),
        grid=(B,),
        in_specs=[
            pl.BlockSpec((1, Sq, D), lambda b: (b, 0, 0)),
            pl.BlockSpec((1, Sk, D), lambda b: (b, 0, 0)),
            _full_spec((D, D)),
            _full_spec((1, D)),
            _full_spec((D, 2 * D)),
            _full_spec((1, 2 * D)),
            _full_spec((D, D)),
            _full_spec((1, D)),
            _full_spec((1, D)),
            _full_spec((1, D)),
        ],
        out_specs=pl.BlockSpec((1, Sq, D), lambda b: (b, 0, 0)),
        compiler_params=pltpu.CompilerParams(
            dimension_semantics=("parallel",)),
    )(xq, xkv, wq, bq.reshape(1, D), wkv, bkv.reshape(1, 2 * D),
      wo, bo.reshape(1, D), ln_g.reshape(1, D), ln_b.reshape(1, D))


def pallas_ffn_block(x, w1, b1, w2, b2, ln_g, ln_b):
    B, S, D = x.shape
    F = w1.shape[1]
    return pl.pallas_call(
        _ffn_block_kernel,
        out_shape=jax.ShapeDtypeStruct((B, S, D), jnp.float32),
        grid=(B,),
        in_specs=[
            pl.BlockSpec((1, S, D), lambda b: (b, 0, 0)),
            _full_spec((D, F)),
            _full_spec((1, F)),
            _full_spec((F, D)),
            _full_spec((1, D)),
            _full_spec((1, D)),
            _full_spec((1, D)),
        ],
        out_specs=pl.BlockSpec((1, S, D), lambda b: (b, 0, 0)),
        compiler_params=pltpu.CompilerParams(
            dimension_semantics=("parallel",)),
    )(x, w1, b1.reshape(1, F), w2, b2.reshape(1, D),
      ln_g.reshape(1, D), ln_b.reshape(1, D))


def _choose_tile(dim, target, align):
    """Largest tile <= target that divides dim and is `align`-aligned; else dim."""
    if dim <= target:
        return dim
    t = (target // align) * align
    while t >= align and dim % t:
        t -= align
    return t if t >= align else dim


def pallas_linear(x, w, b, *, tm=256, tn=256, tk=512):
    """x:(M,K) @ w:(K,N) + b:(N,) -> (M,N), tiled + pipelined.

    Default tiles are sized for v7x's 64 MiB physical / 32 MiB scoped VMEM
    (<< 4 MiB with double buffering); they also fit v5e/v6e comfortably.
    """
    M, K = x.shape
    N = w.shape[1]
    tm = _choose_tile(M, tm, 8)
    tn = _choose_tile(N, tn, 128)
    tk = _choose_tile(K, tk, 128)
    grid = (M // tm, N // tn, K // tk)
    return pl.pallas_call(
        _tiled_linear_kernel,
        out_shape=jax.ShapeDtypeStruct((M, N), jnp.float32),
        grid_spec=pltpu.PrefetchScalarGridSpec(
            num_scalar_prefetch=0,
            grid=grid,
            in_specs=[
                pl.BlockSpec((tm, tk), lambda i, j, k: (i, k)),
                pl.BlockSpec((tk, tn), lambda i, j, k: (k, j)),
                pl.BlockSpec((1, tn), lambda i, j, k: (0, j)),
            ],
            out_specs=pl.BlockSpec((tm, tn), lambda i, j, k: (i, j)),
            scratch_shapes=[pltpu.VMEM((tm, tn), jnp.float32)],
        ),
        compiler_params=pltpu.CompilerParams(
            dimension_semantics=("parallel", "parallel", "arbitrary")),
    )(x, w, b.reshape(1, N))


# --------------------------------------------------------------------------
# Model (glue in plain JAX, each sub-layer = one fused Pallas kernel)
# --------------------------------------------------------------------------

def encoder_layer_forward(p, x, num_heads):
    a = p["self_attn"]
    x = pallas_self_attn_block(x, a["wqkv"], a["bqkv"], a["wo"], a["bo"],
                               p["ln1_g"], p["ln1_b"], num_heads, causal=False)
    x = pallas_ffn_block(x, p["ff_w1"], p["ff_b1"], p["ff_w2"], p["ff_b2"],
                         p["ln2_g"], p["ln2_b"])
    return x


def decoder_layer_forward(p, x, enc_out, num_heads):
    sa = p["self_attn"]
    x = pallas_self_attn_block(x, sa["wqkv"], sa["bqkv"], sa["wo"], sa["bo"],
                               p["ln1_g"], p["ln1_b"], num_heads, causal=True)
    ca = p["enc_dec_attn"]
    x = pallas_cross_attn_block(x, enc_out, ca["wq"], ca["bq"],
                                ca["wkv"], ca["bkv"], ca["wo"], ca["bo"],
                                p["ln2_g"], p["ln2_b"], num_heads)
    x = pallas_ffn_block(x, p["ff_w1"], p["ff_b1"], p["ff_w2"], p["ff_b2"],
                         p["ln3_g"], p["ln3_b"])
    return x


def positional_encoding(max_len, d_model):
    pos = jnp.arange(max_len, dtype=jnp.float32)[:, None]
    div = jnp.exp(jnp.arange(0, d_model, 2, dtype=jnp.float32)
                  * (-math.log(10000.0) / d_model))
    pe = jnp.zeros((max_len, d_model), jnp.float32)
    pe = pe.at[:, 0::2].set(jnp.sin(pos * div))
    pe = pe.at[:, 1::2].set(jnp.cos(pos * div))
    return pe


def transformer_forward(params, src, tgt, num_heads):
    B, Ss = src.shape
    _, St = tgt.shape
    D = params["enc_emb"].shape[1]

    # ---- encoder ----  (embedding gather + pos-enc are JAX glue)
    x = params["enc_emb"][src] + params["pe"][:Ss][None, :, :]
    for lp in params["enc_layers"]:
        x = encoder_layer_forward(lp, x, num_heads)
    enc_out = x

    # ---- decoder ----  (causal mask generated inside the kernel)
    y = params["dec_emb"][tgt] + params["pe"][:St][None, :, :]
    for lp in params["dec_layers"]:
        y = decoder_layer_forward(lp, y, enc_out, num_heads)

    # ---- final projection ----
    logits = pallas_linear(y.reshape(B * St, D),
                           params["final_w"], params["final_b"])
    return logits.reshape(B, St, -1)


# --------------------------------------------------------------------------
# Deterministic parameter init (mirrors nn.Linear / nn.Embedding / LayerNorm)
# --------------------------------------------------------------------------

def init_linear(key, d_in, d_out):
    k1, k2 = jax.random.split(key)
    bound = 1.0 / math.sqrt(d_in)
    w = jax.random.uniform(k1, (d_in, d_out), jnp.float32, -bound, bound)
    b = jax.random.uniform(k2, (d_out,), jnp.float32, -bound, bound)
    return w, b


def init_mha(key, d_model):
    ks = jax.random.split(key, 4)
    wq, bq = init_linear(ks[0], d_model, d_model)
    wk, bk = init_linear(ks[1], d_model, d_model)
    wv, bv = init_linear(ks[2], d_model, d_model)
    wo, bo = init_linear(ks[3], d_model, d_model)
    return {
        # fused weights built once at init (no per-forward concat)
        "wqkv": jnp.concatenate([wq, wk, wv], axis=1),
        "bqkv": jnp.concatenate([bq, bk, bv]),
        "wkv": jnp.concatenate([wk, wv], axis=1),
        "bkv": jnp.concatenate([bk, bv]),
        "wq": wq, "bq": bq,
        "wo": wo, "bo": bo,
    }


def init_enc_layer(key, d_model, ff_dim):
    ks = jax.random.split(key, 3)
    p = {"self_attn": init_mha(ks[0], d_model)}
    p["ff_w1"], p["ff_b1"] = init_linear(ks[1], d_model, ff_dim)
    p["ff_w2"], p["ff_b2"] = init_linear(ks[2], ff_dim, d_model)
    p["ln1_g"] = jnp.ones((d_model,), jnp.float32)
    p["ln1_b"] = jnp.zeros((d_model,), jnp.float32)
    p["ln2_g"] = jnp.ones((d_model,), jnp.float32)
    p["ln2_b"] = jnp.zeros((d_model,), jnp.float32)
    return p


def init_dec_layer(key, d_model, ff_dim):
    ks = jax.random.split(key, 4)
    p = {"self_attn": init_mha(ks[0], d_model),
         "enc_dec_attn": init_mha(ks[1], d_model)}
    p["ff_w1"], p["ff_b1"] = init_linear(ks[2], d_model, ff_dim)
    p["ff_w2"], p["ff_b2"] = init_linear(ks[3], ff_dim, d_model)
    for i in (1, 2, 3):
        p[f"ln{i}_g"] = jnp.ones((d_model,), jnp.float32)
        p[f"ln{i}_b"] = jnp.zeros((d_model,), jnp.float32)
    return p


def init_transformer(key, src_vocab, tgt_vocab, d_model, num_layers,
                     ff_dim, max_len):
    keys = jax.random.split(key, 3 + 2 * num_layers)
    params = {
        "enc_emb": jax.random.normal(keys[0], (src_vocab, d_model), jnp.float32),
        "dec_emb": jax.random.normal(keys[1], (tgt_vocab, d_model), jnp.float32),
        "pe": positional_encoding(max_len, d_model),
        "enc_layers": [init_enc_layer(keys[3 + i], d_model, ff_dim)
                       for i in range(num_layers)],
        "dec_layers": [init_dec_layer(keys[3 + num_layers + i], d_model, ff_dim)
                       for i in range(num_layers)],
    }
    params["final_w"], params["final_b"] = init_linear(keys[2], d_model, tgt_vocab)
    return params


# --------------------------------------------------------------------------
# Main
# --------------------------------------------------------------------------

if __name__ == "__main__":
    SRC_VOCAB = 64
    TGT_VOCAB = 64
    D_MODEL = 32
    NUM_LAYERS = 2
    NUM_HEADS = 4
    FF_HIDDEN = 64
    MAX_LEN = 32
    BATCH = 2
    SRC_SEQ = 8
    TGT_SEQ = 8

    root = jax.random.PRNGKey(0)
    k_param, k_src, k_tgt = jax.random.split(root, 3)

    params = init_transformer(k_param, SRC_VOCAB, TGT_VOCAB, D_MODEL,
                              NUM_LAYERS, FF_HIDDEN, MAX_LEN)

    src = jax.random.randint(k_src, (BATCH, SRC_SEQ), 0, SRC_VOCAB, jnp.int32)
    tgt = jax.random.randint(k_tgt, (BATCH, TGT_SEQ), 0, TGT_VOCAB, jnp.int32)

    logits = transformer_forward(params, src, tgt, NUM_HEADS)
    logits = jax.block_until_ready(logits)

    assert logits.shape == (BATCH, TGT_SEQ, TGT_VOCAB)
    assert bool(jnp.all(jnp.isfinite(logits)))
    print("KERNEL_OK")
</pallas_src>

<mosaic_0001>
module attributes {stable_mosaic.version = 11 : i64} {
  func.func @_self_attn_block_kernel(%arg0: i32, %arg1: memref<1x8x32xf32, #tpu.memory_space<vmem>>, %arg2: memref<32x96xf32, #tpu.memory_space<vmem>>, %arg3: memref<1x96xf32, #tpu.memory_space<vmem>>, %arg4: memref<32x32xf32, #tpu.memory_space<vmem>>, %arg5: memref<1x32xf32, #tpu.memory_space<vmem>>, %arg6: memref<1x32xf32, #tpu.memory_space<vmem>>, %arg7: memref<1x32xf32, #tpu.memory_space<vmem>>, %arg8: memref<1x8x32xf32, #tpu.memory_space<vmem>>) attributes {dimension_semantics = [#tpu.dimension_semantics<parallel>], iteration_bounds = array<i64: 2>, scalar_prefetch = 0 : i64, scratch_operands = 0 : i64, tpu.core_type = #tpu.core_type<tc>, window_params = [{transform_indices = @transform_0, window_bounds = array<i64: 1, 8, 32>}, {pipeline_mode = #tpu.pipeline_mode<synchronous>, transform_indices = @transform_1, window_bounds = array<i64: 32, 96>}, {pipeline_mode = #tpu.pipeline_mode<synchronous>, transform_indices = @transform_2, window_bounds = array<i64: 1, 96>}, {pipeline_mode = #tpu.pipeline_mode<synchronous>, transform_indices = @transform_3, window_bounds = array<i64: 32, 32>}, {pipeline_mode = #tpu.pipeline_mode<synchronous>, transform_indices = @transform_4, window_bounds = array<i64: 1, 32>}, {pipeline_mode = #tpu.pipeline_mode<synchronous>, transform_indices = @transform_5, window_bounds = array<i64: 1, 32>}, {pipeline_mode = #tpu.pipeline_mode<synchronous>, transform_indices = @transform_6, window_bounds = array<i64: 1, 32>}, {transform_indices = @transform_7, window_bounds = array<i64: 1, 8, 32>}]} {
    %c0 = arith.constant 0 : index
    %c0_0 = arith.constant 0 : index
    %c0_1 = arith.constant 0 : index
    %0 = vector.load %arg1[%c0, %c0_0, %c0_1] : memref<1x8x32xf32, #tpu.memory_space<vmem>>, vector<1x8x32xf32>
    %1 = vector.shape_cast %0 : vector<1x8x32xf32> to vector<8x32xf32>
    %c0_2 = arith.constant 0 : index
    %c0_3 = arith.constant 0 : index
    %2 = vector.load %arg2[%c0_2, %c0_3] : memref<32x96xf32, #tpu.memory_space<vmem>>, vector<32x96xf32>
    %cst = arith.constant dense<0.000000e+00> : vector<8x96xf32>
    %3 = tpu.matmul %1, %2, %cst {dimension_numbers = #tpu.dot_dimension_numbers<[1], [0], [0], [1], [0, 0, 1, 1], [], []>} : vector<8x32xf32>, vector<32x96xf32>, vector<8x96xf32> -> vector<8x96xf32>
    %c0_4 = arith.constant 0 : index
    %c0_5 = arith.constant 0 : index
    %4 = vector.load %arg3[%c0_4, %c0_5] : memref<1x96xf32, #tpu.memory_space<vmem>>, vector<1x96xf32>
    %5 = vector.broadcast %4 : vector<1x96xf32> to vector<8x96xf32>
    %6 = arith.addf %3, %5 : vector<8x96xf32>
    %7 = vector.extract_strided_slice %6 {offsets = [0, 0], sizes = [8, 32], strides = [1, 1]} : vector<8x96xf32> to vector<8x32xf32>
    %8 = vector.extract_strided_slice %6 {offsets = [0, 32], sizes = [8, 32], strides = [1, 1]} : vector<8x96xf32> to vector<8x32xf32>
    %9 = vector.extract_strided_slice %6 {offsets = [0, 64], sizes = [8, 32], strides = [1, 1]} : vector<8x96xf32> to vector<8x32xf32>
    %c0_6 = arith.constant 0 : index
    %c0_7 = arith.constant 0 : index
    %10 = vector.load %arg4[%c0_6, %c0_7] : memref<32x32xf32, #tpu.memory_space<vmem>>, vector<32x32xf32>
    %c0_8 = arith.constant 0 : index
    %c0_9 = arith.constant 0 : index
    %11 = vector.load %arg5[%c0_8, %c0_9] : memref<1x32xf32, #tpu.memory_space<vmem>>, vector<1x32xf32>
    %c0_10 = arith.constant 0 : index
    %c0_11 = arith.constant 0 : index
    %12 = vector.load %arg6[%c0_10, %c0_11] : memref<1x32xf32, #tpu.memory_space<vmem>>, vector<1x32xf32>
    %c0_12 = arith.constant 0 : index
    %c0_13 = arith.constant 0 : index
    %13 = vector.load %arg7[%c0_12, %c0_13] : memref<1x32xf32, #tpu.memory_space<vmem>>, vector<1x32xf32>
    %cst_14 = arith.constant 0.353553385 : f32
    %14 = vector.broadcast %cst_14 : f32 to vector<8x32xf32>
    %15 = arith.mulf %7, %14 : vector<8x32xf32>
    %cst_15 = arith.constant 0.000000e+00 : f32
    %16 = vector.broadcast %cst_15 : f32 to vector<8x32xf32>
    %17 = vector.extract_strided_slice %15 {offsets = [0, 0], sizes = [8, 8], strides = [1, 1]} : vector<8x32xf32> to vector<8x8xf32>
    %18 = vector.extract_strided_slice %8 {offsets = [0, 0], sizes = [8, 8], strides = [1, 1]} : vector<8x32xf32> to vector<8x8xf32>
    %19 = vector.extract_strided_slice %9 {offsets = [0, 0], sizes = [8, 8], strides = [1, 1]} : vector<8x32xf32> to vector<8x8xf32>
    %cst_16 = arith.constant dense<0.000000e+00> : vector<8x8xf32>
    %20 = tpu.matmul %17, %18, %cst_16 {dimension_numbers = #tpu.dot_dimension_numbers<[1], [1], [0], [0], [0, 0, 1, 0], [], []>} : vector<8x8xf32>, vector<8x8xf32>, vector<8x8xf32> -> vector<8x8xf32>
    %cst_17 = arith.constant dense<0xFF800000> : vector<8xf32>
    %21 = vector.multi_reduction <maximumf>, %20, %cst_17 [1] : vector<8x8xf32> to vector<8xf32>
    %22 = vector.shape_cast %21 : vector<8xf32> to vector<8x1xf32>
    %23 = vector.broadcast %22 : vector<8x1xf32> to vector<8x8xf32>
    %24 = arith.subf %20, %23 : vector<8x8xf32>
    %25 = math.exp %24 : vector<8x8xf32>
    %cst_18 = arith.constant dense<0.000000e+00> : vector<8xf32>
    %26 = vector.multi_reduction <add>, %25, %cst_18 [1] : vector<8x8xf32> to vector<8xf32>
    %27 = vector.shape_cast %26 : vector<8xf32> to vector<8x1xf32>
    %28 = tpu.reciprocal %27 {approx = true} : vector<8x1xf32> -> vector<8x1xf32>
    %29 = vector.broadcast %28 : vector<8x1xf32> to vector<8x8xf32>
    %30 = arith.mulf %25, %29 : vector<8x8xf32>
    %cst_19 = arith.constant dense<0.000000e+00> : vector<8x8xf32>
    %31 = tpu.matmul %30, %19, %cst_19 {dimension_numbers = #tpu.dot_dimension_numbers<[1], [0], [0], [1], [0, 0, 1, 1], [], []>} : vector<8x8xf32>, vector<8x8xf32>, vector<8x8xf32> -> vector<8x8xf32>
    %32 = vector.extract_strided_slice %10 {offsets = [0, 0], sizes = [8, 32], strides = [1, 1]} : vector<32x32xf32> to vector<8x32xf32>
    %cst_20 = arith.constant dense<0.000000e+00> : vector<8x32xf32>
    %33 = tpu.matmul %31, %32, %cst_20 {dimension_numbers = #tpu.dot_dimension_numbers<[1], [0], [0], [1], [0, 0, 1, 1], [], []>} : vector<8x8xf32>, vector<8x32xf32>, vector<8x32xf32> -> vector<8x32xf32>
    %34 = arith.addf %16, %33 : vector<8x32xf32>
    %35 = vector.extract_strided_slice %15 {offsets = [0, 8], sizes = [8, 8], strides = [1, 1]} : vector<8x32xf32> to vector<8x8xf32>
    %36 = vector.extract_strided_slice %8 {offsets = [0, 8], sizes = [8, 8], strides = [1, 1]} : vector<8x32xf32> to vector<8x8xf32>
    %37 = vector.extract_strided_slice %9 {offsets = [0, 8], sizes = [8, 8], strides = [1, 1]} : vector<8x32xf32> to vector<8x8xf32>
    %cst_21 = arith.constant dense<0.000000e+00> : vector<8x8xf32>
    %38 = tpu.matmul %35, %36, %cst_21 {dimension_numbers = #tpu.dot_dimension_numbers<[1], [1], [0], [0], [0, 0, 1, 0], [], []>} : vector<8x8xf32>, vector<8x8xf32>, vector<8x8xf32> -> vector<8x8xf32>
    %cst_22 = arith.constant dense<0xFF800000> : vector<8xf32>
    %39 = vector.multi_reduction <maximumf>, %38, %cst_22 [1] : vector<8x8xf32> to vector<8xf32>
    %40 = vector.shape_cast %39 : vector<8xf32> to vector<8x1xf32>
    %41 = vector.broadcast %40 : vector<8x1xf32> to vector<8x8xf32>
    %42 = arith.subf %38, %41 : vector<8x8xf32>
    %43 = math.exp %42 : vector<8x8xf32>
    %cst_23 = arith.constant dense<0.000000e+00> : vector<8xf32>
    %44 = vector.multi_reduction <add>, %43, %cst_23 [1] : vector<8x8xf32> to vector<8xf32>
    %45 = vector.shape_cast %44 : vector<8xf32> to vector<8x1xf32>
    %46 = tpu.reciprocal %45 {approx = true} : vector<8x1xf32> -> vector<8x1xf32>
    %47 = vector.broadcast %46 : vector<8x1xf32> to vector<8x8xf32>
    %48 = arith.mulf %43, %47 : vector<8x8xf32>
    %cst_24 = arith.constant dense<0.000000e+00> : vector<8x8xf32>
    %49 = tpu.matmul %48, %37, %cst_24 {dimension_numbers = #tpu.dot_dimension_numbers<[1], [0], [0], [1], [0, 0, 1, 1], [], []>} : vector<8x8xf32>, vector<8x8xf32>, vector<8x8xf32> -> vector<8x8xf32>
    %50 = vector.extract_strided_slice %10 {offsets = [8, 0], sizes = [8, 32], strides = [1, 1]} : vector<32x32xf32> to vector<8x32xf32>
    %cst_25 = arith.constant dense<0.000000e+00> : vector<8x32xf32>
    %51 = tpu.matmul %49, %50, %cst_25 {dimension_numbers = #tpu.dot_dimension_numbers<[1], [0], [0], [1], [0, 0, 1, 1], [], []>} : vector<8x8xf32>, vector<8x32xf32>, vector<8x32xf32> -> vector<8x32xf32>
    %52 = arith.addf %34, %51 : vector<8x32xf32>
    %53 = vector.extract_strided_slice %15 {offsets = [0, 16], sizes = [8, 8], strides = [1, 1]} : vector<8x32xf32> to vector<8x8xf32>
    %54 = vector.extract_strided_slice %8 {offsets = [0, 16], sizes = [8, 8], strides = [1, 1]} : vector<8x32xf32> to vector<8x8xf32>
    %55 = vector.extract_strided_slice %9 {offsets = [0, 16], sizes = [8, 8], strides = [1, 1]} : vector<8x32xf32> to vector<8x8xf32>
    %cst_26 = arith.constant dense<0.000000e+00> : vector<8x8xf32>
    %56 = tpu.matmul %53, %54, %cst_26 {dimension_numbers = #tpu.dot_dimension_numbers<[1], [1], [0], [0], [0, 0, 1, 0], [], []>} : vector<8x8xf32>, vector<8x8xf32>, vector<8x8xf32> -> vector<8x8xf32>
    %cst_27 = arith.constant dense<0xFF800000> : vector<8xf32>
    %57 = vector.multi_reduction <maximumf>, %56, %cst_27 [1] : vector<8x8xf32> to vector<8xf32>
    %58 = vector.shape_cast %57 : vector<8xf32> to vector<8x1xf32>
    %59 = vector.broadcast %58 : vector<8x1xf32> to vector<8x8xf32>
    %60 = arith.subf %56, %59 : vector<8x8xf32>
    %61 = math.exp %60 : vector<8x8xf32>
    %cst_28 = arith.constant dense<0.000000e+00> : vector<8xf32>
    %62 = vector.multi_reduction <add>, %61, %cst_28 [1] : vector<8x8xf32> to vector<8xf32>
    %63 = vector.shape_cast %62 : vector<8xf32> to vector<8x1xf32>
    %64 = tpu.reciprocal %63 {approx = true} : vector<8x1xf32> -> vector<8x1xf32>
    %65 = vector.broadcast %64 : vector<8x1xf32> to vector<8x8xf32>
    %66 = arith.mulf %61, %65 : vector<8x8xf32>
    %cst_29 = arith.constant dense<0.000000e+00> : vector<8x8xf32>
    %67 = tpu.matmul %66, %55, %cst_29 {dimension_numbers = #tpu.dot_dimension_numbers<[1], [0], [0], [1], [0, 0, 1, 1], [], []>} : vector<8x8xf32>, vector<8x8xf32>, vector<8x8xf32> -> vector<8x8xf32>
    %68 = vector.extract_strided_slice %10 {offsets = [16, 0], sizes = [8, 32], strides = [1, 1]} : vector<32x32xf32> to vector<8x32xf32>
    %cst_30 = arith.constant dense<0.000000e+00> : vector<8x32xf32>
    %69 = tpu.matmul %67, %68, %cst_30 {dimension_numbers = #tpu.dot_dimension_numbers<[1], [0], [0], [1], [0, 0, 1, 1], [], []>} : vector<8x8xf32>, vector<8x32xf32>, vector<8x32xf32> -> vector<8x32xf32>
    %70 = arith.addf %52, %69 : vector<8x32xf32>
    %71 = vector.extract_strided_slice %15 {offsets = [0, 24], sizes = [8, 8], strides = [1, 1]} : vector<8x32xf32> to vector<8x8xf32>
    %72 = vector.extract_strided_slice %8 {offsets = [0, 24], sizes = [8, 8], strides = [1, 1]} : vector<8x32xf32> to vector<8x8xf32>
    %73 = vector.extract_strided_slice %9 {offsets = [0, 24], sizes = [8, 8], strides = [1, 1]} : vector<8x32xf32> to vector<8x8xf32>
    %cst_31 = arith.constant dense<0.000000e+00> : vector<8x8xf32>
    %74 = tpu.matmul %71, %72, %cst_31 {dimension_numbers = #tpu.dot_dimension_numbers<[1], [1], [0], [0], [0, 0, 1, 0], [], []>} : vector<8x8xf32>, vector<8x8xf32>, vector<8x8xf32> -> vector<8x8xf32>
    %cst_32 = arith.constant dense<0xFF800000> : vector<8xf32>
    %75 = vector.multi_reduction <maximumf>, %74, %cst_32 [1] : vector<8x8xf32> to vector<8xf32>
    %76 = vector.shape_cast %75 : vector<8xf32> to vector<8x1xf32>
    %77 = vector.broadcast %76 : vector<8x1xf32> to vector<8x8xf32>
    %78 = arith.subf %74, %77 : vector<8x8xf32>
    %79 = math.exp %78 : vector<8x8xf32>
    %cst_33 = arith.constant dense<0.000000e+00> : vector<8xf32>
    %80 = vector.multi_reduction <add>, %79, %cst_33 [1] : vector<8x8xf32> to vector<8xf32>
    %81 = vector.shape_cast %80 : vector<8xf32> to vector<8x1xf32>
    %82 = tpu.reciprocal %81 {approx = true} : vector<8x1xf32> -> vector<8x1xf32>
    %83 = vector.broadcast %82 : vector<8x1xf32> to vector<8x8xf32>
    %84 = arith.mulf %79, %83 : vector<8x8xf32>
    %cst_34 = arith.constant dense<0.000000e+00> : vector<8x8xf32>
    %85 = tpu.matmul %84, %73, %cst_34 {dimension_numbers = #tpu.dot_dimension_numbers<[1], [0], [0], [1], [0, 0, 1, 1], [], []>} : vector<8x8xf32>, vector<8x8xf32>, vector<8x8xf32> -> vector<8x8xf32>
    %86 = vector.extract_strided_slice %10 {offsets = [24, 0], sizes = [8, 32], strides = [1, 1]} : vector<32x32xf32> to vector<8x32xf32>
    %cst_35 = arith.constant dense<0.000000e+00> : vector<8x32xf32>
    %87 = tpu.matmul %85, %86, %cst_35 {dimension_numbers = #tpu.dot_dimension_numbers<[1], [0], [0], [1], [0, 0, 1, 1], [], []>} : vector<8x8xf32>, vector<8x32xf32>, vector<8x32xf32> -> vector<8x32xf32>
    %88 = arith.addf %70, %87 : vector<8x32xf32>
    %89 = vector.broadcast %11 : vector<1x32xf32> to vector<8x32xf32>
    %90 = arith.addf %88, %89 : vector<8x32xf32>
    %91 = arith.addf %1, %90 : vector<8x32xf32>
    %cst_36 = arith.constant dense<0.000000e+00> : vector<8xf32>
    %92 = vector.multi_reduction <add>, %91, %cst_36 [1] : vector<8x32xf32> to vector<8xf32>
    %93 = vector.shape_cast %92 : vector<8xf32> to vector<8x1xf32>
    %cst_37 = arith.constant 3.200000e+01 : f32
    %94 = vector.broadcast %cst_37 : f32 to vector<8x1xf32>
    %95 = arith.divf %93, %94 : vector<8x1xf32>
    %96 = vector.broadcast %95 : vector<8x1xf32> to vector<8x32xf32>
    %97 = arith.subf %91, %96 : vector<8x32xf32>
    %98 = arith.mulf %97, %97 : vector<8x32xf32>
    %cst_38 = arith.constant dense<0.000000e+00> : vector<8xf32>
    %99 = vector.multi_reduction <add>, %98, %cst_38 [1] : vector<8x32xf32> to vector<8xf32>
    %100 = vector.shape_cast %99 : vector<8xf32> to vector<8x1xf32>
    %cst_39 = arith.constant 3.200000e+01 : f32
    %101 = vector.broadcast %cst_39 : f32 to vector<8x1xf32>
    %102 = arith.divf %100, %101 : vector<8x1xf32>
    %103 = vector.broadcast %95 : vector<8x1xf32> to vector<8x32xf32>
    %104 = arith.subf %91, %103 : vector<8x32xf32>
    %cst_40 = arith.constant 9.99999974E-6 : f32
    %105 = vector.broadcast %cst_40 : f32 to vector<8x1xf32>
    %106 = arith.addf %102, %105 : vector<8x1xf32>
    %107 = math.rsqrt %106 : vector<8x1xf32>
    %108 = vector.broadcast %107 : vector<8x1xf32> to vector<8x32xf32>
    %109 = arith.mulf %104, %108 : vector<8x32xf32>
    %110 = vector.broadcast %12 : vector<1x32xf32> to vector<8x32xf32>
    %111 = arith.mulf %109, %110 : vector<8x32xf32>
    %112 = vector.broadcast %13 : vector<1x32xf32> to vector<8x32xf32>
    %113 = arith.addf %111, %112 : vector<8x32xf32>
    %c0_41 = arith.constant 0 : index
    %c0_42 = arith.constant 0 : index
    %c0_43 = arith.constant 0 : index
    %114 = vector.load %arg8[%c0_41, %c0_42, %c0_43] : memref<1x8x32xf32, #tpu.memory_space<vmem>>, vector<1x8x32xf32>
    %115 = vector.shape_cast %114 : vector<1x8x32xf32> to vector<8x32xf32>
    %116 = vector.shape_cast %113 : vector<8x32xf32> to vector<1x8x32xf32>
    tpu.vector_store %arg8[%c0_41, %c0_42, %c0_43], %116 {strides = array<i32>} : memref<1x8x32xf32, #tpu.memory_space<vmem>>, vector<1x8x32xf32>,
    return
  }
  func.func @transform_0(%arg0: i32) -> (i32, i32, i32) {
    %c0_i32 = arith.constant 0 : i32
    %c0_i32_0 = arith.constant 0 : i32
    %c0_i32_1 = arith.constant 0 : i32
    return %arg0, %c0_i32, %c0_i32_0 : i32, i32, i32
  }
  func.func @transform_1(%arg0: i32) -> (i32, i32) {
    %c0_i32 = arith.constant 0 : i32
    %c0_i32_0 = arith.constant 0 : i32
    %c0_i32_1 = arith.constant 0 : i32
    return %c0_i32, %c0_i32_0 : i32, i32
  }
  func.func @transform_2(%arg0: i32) -> (i32, i32) {
    %c0_i32 = arith.constant 0 : i32
    %c0_i32_0 = arith.constant 0 : i32
    %c0_i32_1 = arith.constant 0 : i32
    return %c0_i32, %c0_i32_0 : i32, i32
  }
  func.func @transform_3(%arg0: i32) -> (i32, i32) {
    %c0_i32 = arith.constant 0 : i32
    %c0_i32_0 = arith.constant 0 : i32
    %c0_i32_1 = arith.constant 0 : i32
    return %c0_i32, %c0_i32_0 : i32, i32
  }
  func.func @transform_4(%arg0: i32) -> (i32, i32) {
    %c0_i32 = arith.constant 0 : i32
    %c0_i32_0 = arith.constant 0 : i32
    %c0_i32_1 = arith.constant 0 : i32
    return %c0_i32, %c0_i32_0 : i32, i32
  }
  func.func @transform_5(%arg0: i32) -> (i32, i32) {
    %c0_i32 = arith.constant 0 : i32
    %c0_i32_0 = arith.constant 0 : i32
    %c0_i32_1 = arith.constant 0 : i32
    return %c0_i32, %c0_i32_0 : i32, i32
  }
  func.func @transform_6(%arg0: i32) -> (i32, i32) {
    %c0_i32 = arith.constant 0 : i32
    %c0_i32_0 = arith.constant 0 : i32
    %c0_i32_1 = arith.constant 0 : i32
    return %c0_i32, %c0_i32_0 : i32, i32
  }
  func.func @transform_7(%arg0: i32) -> (i32, i32, i32) {
    %c0_i32 = arith.constant 0 : i32
    %c0_i32_0 = arith.constant 0 : i32
    %c0_i32_1 = arith.constant 0 : i32
    return %arg0, %c0_i32, %c0_i32_0 : i32, i32, i32
  }
}

</mosaic_0001>

<llo_original>
// kernel: tpu_custom_call.1
$region0: #{tpu_custom_call.1}
  #allocation0 [shape = 'u32[]', space=smem, size = 0x4, offset = 0x4, fixed_abs, tag = 'smem constant byte address 0x4 - core index']
  #allocation1 [shape = 'u32[72,128]{1,0:T(1,128)}', space=vmem, size = 0x9000, scoped, tag = 'internal scratch']
  %s0 = inlined_call_operand.hbm [shape: f32[2,8,32], index: 0, kind: input, shape index: {}]
  %s1 = inlined_call_operand.hbm [shape: f32[32,96], index: 1, kind: input, shape index: {}]
  %s2 = inlined_call_operand.vmem [shape: f32[1,96], index: 2, kind: input, shape index: {}]
  %s3 = inlined_call_operand.hbm [shape: f32[32,32], index: 3, kind: input, shape index: {}]
  %s4 = inlined_call_operand.vmem [shape: f32[1,32], index: 4, kind: input, shape index: {}]
  %s5 = inlined_call_operand.vmem [shape: f32[1,32], index: 5, kind: input, shape index: {}]
  %s6 = inlined_call_operand.vmem [shape: f32[1,32], index: 6, kind: input, shape index: {}]
  %s7 = inlined_call_operand.hbm [shape: f32[2,8,32], index: 7, kind: output, shape index: {}]
  %s8 = sld [smem:[#allocation0]]
  $region73: #{tpu_custom_call.1} parent=0
    _
  %s10 = ssub.s32 1, %s8
  %s11 = scalar_select 0, %s10, %s8
  $region1: #{tpu_custom_call.1} parent=0
    #allocation2 [shape = 'u8[8192]{0}', space=vmem, size = 0x2000, scoped, tag = 'input window, operand 0']
    #allocation3 [shape = 's32[2]{0}', space=sflag, size = 0x8, scoped, tag = 'scoped memory for tpu_custom_call.1']
    #allocation4 [shape = 's32[2]{0}', space=sflag, size = 0x8, scoped, tag = 'scoped memory for tpu_custom_call.1']
    #allocation5 [shape = 'u8[16384]{0}', space=vmem, size = 0x4000, scoped, tag = 'input window, operand 1, single buffered']
    #allocation6 [shape = 's32[1]{0}', space=sflag, size = 0x4, scoped, tag = 'scoped memory for tpu_custom_call.1']
    #allocation7 [shape = 'u8[16384]{0}', space=vmem, size = 0x4000, scoped, tag = 'input window, operand 3, single buffered']
    #allocation8 [shape = 'u8[8192]{0}', space=vmem, size = 0x2000, scoped, tag = 'output window, operand 0']
    %12 = vsyncpa [#allocation3], 0
    %s13 = scalar_lea.sflag [#allocation3], 1
    %14 = vsyncpa %s13, 0
    %15 = vsyncpa [#allocation6], 0
    %16 = vsyncpa [#allocation4], 0
    %s17 = scalar_lea.sflag [#allocation4], 1
    %18 = vsyncpa %s17, 0
    loop: start=0, step=1, limit=4
    $region2: #{tpu_custom_call.1} parent=1 // loop_pre_header
      _
    $region3: #{tpu_custom_call.1} parent=1 // loop_header
      %s20 = sphi 0, %s24
      %p21 = scmp.ge.s32.totalorder %s20, 4
      %s30 = sphi 0, %s32
      %s33 = sphi 0, %s30
      %s34 = sphi 0, %s33
      %s50 = sphi 0, %s34
      %s54 = sphi 0, %s54
      %s56 = sphi 0, %s54
      %s57 = sphi 0, %s56
      %s71 = sphi 0, %s57
      %s75 = sphi 0, %s75
      %s77 = sphi 0, %s75
      %s78 = sphi 0, %s77
      %s92 = sphi 0, %s78
      %s96 = sphi 0, %s96
      %s98 = sphi 0, %s96
      %s99 = sphi 0, %s98
      %s113 = sphi 0, %s99
      %s117 = sphi 0, %s117
      %s119 = sphi 0, %s117
      %s120 = sphi 0, %s119
      %s134 = sphi 0, %s120
      %s138 = sphi 0, %s138
      %s140 = sphi 0, %s138
      %s141 = sphi 0, %s140
      %s155 = sphi 0, %s141
      %s159 = sphi 0, %s159
      %s161 = sphi 0, %s159
      %s162 = sphi 0, %s161
      %s176 = sphi 0, %s162
      %s182 = sphi 0, %s184
      %s185 = sphi 0, %s182
      %s186 = sphi 0, %s185
      %s202 = sphi 0, %s186
    $region4: #{tpu_custom_call.1} parent=1 // loop_header_branch
      %23 = sbr.rel (%p21) target = $region8
    $region5: #{tpu_custom_call.1} parent=1 // loop_body
      %s25 = ssub.s32 %s20, 1
      %s26 = ssub.s32 %s20, 2
      %s27 = sadd.s32 %s20, 1
      %s28 = ssub.s32 %s20, %s27
      %p29 = scmp.eq.s32.totalorder %s28, 0
      %s31 = sadd.s32 %s30, 1
      %s32 = scalar_select %p29, %s30, %s31
      %p35 = pneg %p29
      %p36 = scmp.eq.s32.totalorder %s20, 1
      %p37 = por %p35, %p36
      %p38 = scmp.ne.s32.totalorder %s30, %s33
      %p39 = scmp.eq.s32.totalorder %s20, 0
      %p40 = por %p38, %p39
      %p41 = scmp.ne.s32.totalorder %s30, %s33
      %p42 = scmp.eq.s32.totalorder %s25, 1
      %p43 = por %p41, %p42
      %p44 = scmp.ne.s32.totalorder %s33, %s34
      %p45 = scmp.eq.s32.totalorder %s25, 0
      %p46 = por %p44, %p45
      %p47 = scmp.ne.s32.totalorder %s33, %s34
      %p48 = scmp.eq.s32.totalorder %s26, 1
      %p49 = por %p47, %p48
      %p51 = scmp.ne.s32.totalorder %s34, %s50
      %p52 = scmp.eq.s32.totalorder %s26, 0
      %p53 = por %p51, %p52
      %s55 = sadd.s32 %s54, 1
      %p58 = scmp.eq.s32.totalorder %s20, 1
      %p59 = scmp.ne.s32.totalorder %s54, %s56
      %p60 = scmp.eq.s32.totalorder %s20, 0
      %p61 = por %p59, %p60
      %p62 = scmp.ne.s32.totalorder %s54, %s56
      %p63 = scmp.eq.s32.totalorder %s25, 1
      %p64 = por %p62, %p63
      %p65 = scmp.ne.s32.totalorder %s56, %s57
      %p66 = scmp.eq.s32.totalorder %s25, 0
      %p67 = por %p65, %p66
      %p68 = scmp.ne.s32.totalorder %s56, %s57
      %p69 = scmp.eq.s32.totalorder %s26, 1
      %p70 = por %p68, %p69
      %p72 = scmp.ne.s32.totalorder %s57, %s71
      %p73 = scmp.eq.s32.totalorder %s26, 0
      %p74 = por %p72, %p73
      %s76 = sadd.s32 %s75, 1
      %p79 = scmp.eq.s32.totalorder %s20, 1
      %p80 = scmp.ne.s32.totalorder %s75, %s77
      %p81 = scmp.eq.s32.totalorder %s20, 0
      %p82 = por %p80, %p81
      %p83 = scmp.ne.s32.totalorder %s75, %s77
      %p84 = scmp.eq.s32.totalorder %s25, 1
      %p85 = por %p83, %p84
      %p86 = scmp.ne.s32.totalorder %s77, %s78
      %p87 = scmp.eq.s32.totalorder %s25, 0
      %p88 = por %p86, %p87
      %p89 = scmp.ne.s32.totalorder %s77, %s78
      %p90 = scmp.eq.s32.totalorder %s26, 1
      %p91 = por %p89, %p90
      %p93 = scmp.ne.s32.totalorder %s78, %s92
      %p94 = scmp.eq.s32.totalorder %s26, 0
      %p95 = por %p93, %p94
      %s97 = sadd.s32 %s96, 1
      %p100 = scmp.eq.s32.totalorder %s20, 1
      %p101 = scmp.ne.s32.totalorder %s96, %s98
      %p102 = scmp.eq.s32.totalorder %s20, 0
      %p103 = por %p101, %p102
      %p104 = scmp.ne.s32.totalorder %s96, %s98
      %p105 = scmp.eq.s32.totalorder %s25, 1
      %p106 = por %p104, %p105
      %p107 = scmp.ne.s32.totalorder %s98, %s99
      %p108 = scmp.eq.s32.totalorder %s25, 0
      %p109 = por %p107, %p108
      %p110 = scmp.ne.s32.totalorder %s98, %s99
      %p111 = scmp.eq.s32.totalorder %s26, 1
      %p112 = por %p110, %p111
      %p114 = scmp.ne.s32.totalorder %s99, %s113
      %p115 = scmp.eq.s32.totalorder %s26, 0
      %p116 = por %p114, %p115
      %s118 = sadd.s32 %s117, 1
      %p121 = scmp.eq.s32.totalorder %s20, 1
      %p122 = scmp.ne.s32.totalorder %s117, %s119
      %p123 = scmp.eq.s32.totalorder %s20, 0
      %p124 = por %p122, %p123
      %p125 = scmp.ne.s32.totalorder %s117, %s119
      %p126 = scmp.eq.s32.totalorder %s25, 1
      %p127 = por %p125, %p126
      %p128 = scmp.ne.s32.totalorder %s119, %s120
      %p129 = scmp.eq.s32.totalorder %s25, 0
      %p130 = por %p128, %p129
      %p131 = scmp.ne.s32.totalorder %s119, %s120
      %p132 = scmp.eq.s32.totalorder %s26, 1
      %p133 = por %p131, %p132
      %p135 = scmp.ne.s32.totalorder %s120, %s134
      %p136 = scmp.eq.s32.totalorder %s26, 0
      %p137 = por %p135, %p136
      %s139 = sadd.s32 %s138, 1
      %p142 = scmp.eq.s32.totalorder %s20, 1
      %p143 = scmp.ne.s32.totalorder %s138, %s140
      %p144 = scmp.eq.s32.totalorder %s20, 0
      %p145 = por %p143, %p144
      %p146 = scmp.ne.s32.totalorder %s138, %s140
      %p147 = scmp.eq.s32.totalorder %s25, 1
      %p148 = por %p146, %p147
      %p149 = scmp.ne.s32.totalorder %s140, %s141
      %p150 = scmp.eq.s32.totalorder %s25, 0
      %p151 = por %p149, %p150
      %p152 = scmp.ne.s32.totalorder %s140, %s141
      %p153 = scmp.eq.s32.totalorder %s26, 1
      %p154 = por %p152, %p153
      %p156 = scmp.ne.s32.totalorder %s141, %s155
      %p157 = scmp.eq.s32.totalorder %s26, 0
      %p158 = por %p156, %p157
      %s160 = sadd.s32 %s159, 1
      %p163 = scmp.eq.s32.totalorder %s20, 1
      %p164 = scmp.ne.s32.totalorder %s159, %s161
      %p165 = scmp.eq.s32.totalorder %s20, 0
      %p166 = por %p164, %p165
      %p167 = scmp.ne.s32.totalorder %s159, %s161
      %p168 = scmp.eq.s32.totalorder %s25, 1
      %p169 = por %p167, %p168
      %p170 = scmp.ne.s32.totalorder %s161, %s162
      %p171 = scmp.eq.s32.totalorder %s25, 0
      %p172 = por %p170, %p171
      %p173 = scmp.ne.s32.totalorder %s161, %s162
      %p174 = scmp.eq.s32.totalorder %s26, 1
      %p175 = por %p173, %p174
      %p177 = scmp.ne.s32.totalorder %s162, %s176
      %p178 = scmp.eq.s32.totalorder %s26, 0
      %p179 = por %p177, %p178
      %s180 = ssub.s32 %s20, %s27
      %p181 = scmp.eq.s32.totalorder %s180, 0
      %s183 = sadd.s32 %s182, 1
      %s184 = scalar_select %p181, %s182, %s183
      %p187 = pneg %p181
      %p188 = scmp.eq.s32.totalorder %s20, 1
      %p189 = por %p187, %p188
      %p190 = scmp.ne.s32.totalorder %s182, %s185
      %p191 = scmp.eq.s32.totalorder %s20, 0
      %p192 = por %p190, %p191
      %p193 = scmp.ne.s32.totalorder %s182, %s185
      %p194 = scmp.eq.s32.totalorder %s25, 1
      %p195 = por %p193, %p194
      %p196 = scmp.ne.s32.totalorder %s185, %s186
      %p197 = scmp.eq.s32.totalorder %s25, 0
      %p198 = por %p196, %p197
      %p199 = scmp.ne.s32.totalorder %s185, %s186
      %p200 = scmp.eq.s32.totalorder %s26, 1
      %p201 = por %p199, %p200
      %p203 = scmp.ne.s32.totalorder %s186, %s202
      %p204 = scmp.eq.s32.totalorder %s26, 0
      %p205 = por %p203, %p204
      %p206 = scmp.le.s32.totalorder 1, %s20
      %p207 = scmp.lt.s32.totalorder %s20, 3
      %p208 = pnand %p206, %p207
      %p209 = pneg %p208
      // Predicated region
      $region9: #{tpu_custom_call.1} parent=5 // pred_check
        _
      $region10: #{tpu_custom_call.1} parent=5 // pred_check_branch
        %211 = sbr.rel (%p208) target = $region12
      $region11: #{tpu_custom_call.1} parent=5 // pred_region
        %s212 = ssub.s32 %s20, 1
        // Predicated region
        $region13: #{tpu_custom_call.1} parent=11 // pred_check
          %p213 = pneg %p67
        $region14: #{tpu_custom_call.1} parent=11 // pred_check_branch
          %215 = sbr.rel (%p213) target = $region16
        $region15: #{tpu_custom_call.1} parent=11 // pred_region
          %217 = vsyncadd [#allocation6], 0
          %s218 = sshll.u32 %s1, 4
          %s219 = int_to_ptr.hbm [resolvable:$true] %s218
          %s220 = sshll.u32 [#allocation5], 4
          %s221 = int_to_ptr.vmem [resolvable:$true] %s220
          %226 = dma.hbm_to_vmem [thread:$0]  %s219, 512, %s221, [#allocation6], 128, 128, 8
        $region16: #{tpu_custom_call.1} parent=11 // pred_fallthru
          _
        // Predicated region
        $region17: #{tpu_custom_call.1} parent=11 // pred_check
          %p227 = pneg %p88
        $region18: #{tpu_custom_call.1} parent=11 // pred_check_branch
          %229 = sbr.rel (%p227) target = $region20
        $region19: #{tpu_custom_call.1} parent=11 // pred_region
          _
        $region20: #{tpu_custom_call.1} parent=11 // pred_fallthru
          _
        // Predicated region
        $region21: #{tpu_custom_call.1} parent=11 // pred_check
          %p230 = pneg %p109
        $region22: #{tpu_custom_call.1} parent=11 // pred_check_branch
          %232 = sbr.rel (%p230) target = $region24
        $region23: #{tpu_custom_call.1} parent=11 // pred_region
          %234 = vsyncadd [#allocation6], 0
          %s235 = sshll.u32 %s3, 4
          %s236 = int_to_ptr.hbm [resolvable:$true] %s235
          %s237 = sshll.u32 [#allocation7], 4
          %s238 = int_to_ptr.vmem [resolvable:$true] %s237
          %243 = dma.hbm_to_vmem [thread:$0]  %s236, 512, %s238, [#allocation6], 128, 128, 8
        $region24: #{tpu_custom_call.1} parent=11 // pred_fallthru
          _
        // Predicated region
        $region25: #{tpu_custom_call.1} parent=11 // pred_check
          %p244 = pneg %p130
        $region26: #{tpu_custom_call.1} parent=11 // pred_check_branch
          %246 = sbr.rel (%p244) target = $region28
        $region27: #{tpu_custom_call.1} parent=11 // pred_region
          _
        $region28: #{tpu_custom_call.1} parent=11 // pred_fallthru
          _
        // Predicated region
        $region29: #{tpu_custom_call.1} parent=11 // pred_check
          %p247 = pneg %p151
        $region30: #{tpu_custom_call.1} parent=11 // pred_check_branch
          %249 = sbr.rel (%p247) target = $region32
        $region31: #{tpu_custom_call.1} parent=11 // pred_region
          _
        $region32: #{tpu_custom_call.1} parent=11 // pred_fallthru
          _
        // Predicated region
        $region33: #{tpu_custom_call.1} parent=11 // pred_check
          %p250 = pneg %p172
        $region34: #{tpu_custom_call.1} parent=11 // pred_check_branch
          %252 = sbr.rel (%p250) target = $region36
        $region35: #{tpu_custom_call.1} parent=11 // pred_region
          _
        $region36: #{tpu_custom_call.1} parent=11 // pred_fallthru
          _
      $region12: #{tpu_custom_call.1} parent=5 // pred_fallthru
        _
      %p253 = scmp.lt.s32.totalorder %s20, 2
      // Predicated region
      $region37: #{tpu_custom_call.1} parent=5 // pred_check
        %p254 = pneg %p253
      $region38: #{tpu_custom_call.1} parent=5 // pred_check_branch
        %256 = sbr.rel (%p254) target = $region40
      $region39: #{tpu_custom_call.1} parent=5 // pred_region
        // Predicated region
        $region41: #{tpu_custom_call.1} parent=39 // pred_check
          %p257 = pneg %p40
        $region42: #{tpu_custom_call.1} parent=39 // pred_check_branch
          %259 = sbr.rel (%p257) target = $region44
        $region43: #{tpu_custom_call.1} parent=39 // pred_region
          %s260 = sand.u32 %s30, 1
          %s261 = scalar_lea.sflag [#allocation3], %s260
          %s262 = sand.u32 %s30, 1
          %s263 = smul.addr %s262, 8
          %s264 = scalar_lea.vmem [#allocation2], %s263
          %266 = vsyncadd %s261, 0
          %s267 = smul.addr %s20, 8
          %s268 = scalar_lea.hbm %s0, %s267
          %s270 = sshll.u32 %s268, 4
          %s271 = int_to_ptr.hbm [resolvable:$true] %s270
          %s272 = sshll.u32 %s264, 4
          %s273 = int_to_ptr.vmem [resolvable:$true] %s272
          %275 = dma.hbm_to_vmem [thread:$0]  %s271, 128, %s273, %s261
        $region44: #{tpu_custom_call.1} parent=39 // pred_fallthru
          _
      $region40: #{tpu_custom_call.1} parent=5 // pred_fallthru
        _
      %p276 = scmp.le.s32.totalorder 1, %s20
      %p277 = scmp.lt.s32.totalorder %s20, 3
      %p278 = pnand %p276, %p277
      %p279 = pneg %p278
      // Predicated region
      $region45: #{tpu_custom_call.1} parent=5 // pred_check
        _
      $region46: #{tpu_custom_call.1} parent=5 // pred_check_branch
        %281 = sbr.rel (%p278) target = $region48
      $region47: #{tpu_custom_call.1} parent=5 // pred_region
        %s282 = ssub.s32 %s20, 1
        %s283 = sand.u32 %s33, 1
        %s284 = scalar_lea.sflag [#allocation3], %s283
        %s285 = sand.u32 %s33, 1
        %s286 = smul.addr %s285, 8
        %s287 = scalar_lea.vmem [#allocation2], %s286
        // Predicated region
        $region49: #{tpu_custom_call.1} parent=47 // pred_check
          %p288 = pneg %p46
        $region50: #{tpu_custom_call.1} parent=47 // pred_check_branch
          %290 = sbr.rel (%p288) target = $region52
        $region51: #{tpu_custom_call.1} parent=47 // pred_region
          %292 = dma.done %s284, 128
        $region52: #{tpu_custom_call.1} parent=47 // pred_fallthru
          _
        // Predicated region
        $region53: #{tpu_custom_call.1} parent=47 // pred_check
          %p293 = pneg %p67
        $region54: #{tpu_custom_call.1} parent=47 // pred_check_branch
          %295 = sbr.rel (%p293) target = $region56
        $region55: #{tpu_custom_call.1} parent=47 // pred_region
          %297 = dma.done [#allocation6], 512
        $region56: #{tpu_custom_call.1} parent=47 // pred_fallthru
          _
        // Predicated region
        $region57: #{tpu_custom_call.1} parent=47 // pred_check
          %p298 = pneg %p109
        $region58: #{tpu_custom_call.1} parent=47 // pred_check_branch
          %300 = sbr.rel (%p298) target = $region60
        $region59: #{tpu_custom_call.1} parent=47 // pred_region
          %302 = dma.done [#allocation6], 512
        $region60: #{tpu_custom_call.1} parent=47 // pred_fallthru
          _
        %s303 = sand.u32 %s33, 1
        %s304 = scalar_lea.sflag [#allocation3], %s303
        %s305 = sand.u32 %s33, 1
        %s306 = smul.addr %s305, 8
        %s307 = scalar_lea.vmem [#allocation2], %s306
        %p308 = pneg %p46
        %p309 = pneg %p43
        %p310 = pneg %p67
        %p311 = pneg %p64
        %p312 = pneg %p88
        %p313 = pneg %p85
        %p314 = pneg %p109
        %p315 = pneg %p106
        %p316 = pneg %p130
        %p317 = pneg %p127
        %p318 = pneg %p151
        %p319 = pneg %p148
        %p320 = pneg %p172
        %p321 = pneg %p169
        %p322 = pneg %p198
        %p323 = pneg %p195
        %s324 = sand.u32 %s185, 1
        %s325 = scalar_lea.sflag [#allocation4], %s324
        %s326 = sand.u32 %s185, 1
        %s327 = smul.addr %s326, 8
        %s328 = scalar_lea.vmem [#allocation8], %s327
        %v329 = vld [vmem:[%s287] sm:$0xff]
        %v330 = vld [vmem:[#allocation5] sm:$0xff]
        %v331 = vld [vmem:[#allocation5 + $0x8] sm:$0xff]
        %v332 = vld [vmem:[#allocation5 + $0x10] sm:$0xff]
        %v333 = vld [vmem:[#allocation5 + $0x18] sm:$0xff]
        %v334 = vld [vmem:[%s2] sm:$0x1]
        %v336 = vperm.slane %v334, 0
        %vm338 = vcmask 261120
        %v340 = vsel %vm338, %v329, 0
        %342 = vmatpush.msra.mxu0 0.0
        %343 = vmatpush.msra.mxu0 0.0
        %344 = vmatpush.msra.mxu0 0.0
        %345 = vmatpush.msra.mxu0 0.0
        %346 = vmatpush.msra.mxu0 0.0
        %347 = vmatpush.msra.mxu0 0.0
        %348 = vmatpush.msra.mxu0 0.0
        %349 = vmatpush.msra.mxu0 0.0
        %350 = vmatpush.msra.mxu0 0.0
        %351 = vmatpush.msra.mxu0 0.0
        %352 = vmatpush.msra.mxu0 0.0
        %353 = vmatpush.msra.mxu0 0.0
        %354 = vmatpush.msra.mxu0 %v333
        %355 = vmatpush.msra.mxu0 %v332
        %356 = vmatpush.msra.mxu0 %v331
        %357 = vmatpush.msra.mxu0 %v330
        %358 = vmatmul.f32.gmra.mxu0 %v340
        %v359 = vpop.f32.mrf.mxu0
        %v360 = vadd.f32 %v336, %v359
        %361 = vdwg.mxu0
        %v362 = vld [vmem:[#allocation7] sm:$0xff]
        %v363 = vld [vmem:[#allocation7 + $0x8] sm:$0xff]
        %v364 = vld [vmem:[#allocation7 + $0x10] sm:$0xff]
        %v365 = vld [vmem:[#allocation7 + $0x18] sm:$0xff]
        %v366 = vld [vmem:[%s4] sm:$0x1]
        %v367 = vld [vmem:[%s5] sm:$0x1]
        %v368 = vld [vmem:[%s6] sm:$0x1]
        %v369 = vmul.f32 %v360, 0.35355338
        %371 = vrot.lane.b32.xlu0 %v360, 96
        %v372 = vpop.permute.xlu0 %371
        %vm373 = vcmask 64512
        %v375 = vsel %vm373, %v369, 0
        %v377 = vsel %vm373, %v372, 0
        %379 = vmatpush.xpose.msra.mxu0 0.0
        %380 = vmatpush.xpose.msra.mxu0 0.0
        %381 = vmatpush.xpose.msra.mxu0 0.0
        %382 = vmatpush.xpose.msra.mxu0 0.0
        %383 = vmatpush.xpose.msra.mxu0 0.0
        %384 = vmatpush.xpose.msra.mxu0 0.0
        %385 = vmatpush.xpose.msra.mxu0 0.0
        %386 = vmatpush.xpose.msra.mxu0 0.0
        %387 = vmatpush.xpose.msra.mxu0 0.0
        %388 = vmatpush.xpose.msra.mxu0 0.0
        %389 = vmatpush.xpose.msra.mxu0 0.0
        %390 = vmatpush.xpose.msra.mxu0 0.0
        %391 = vmatpush.xpose.msra.mxu0 0.0
        %392 = vmatpush.xpose.msra.mxu0 0.0
        %393 = vmatpush.xpose.msra.mxu0 0.0
        %394 = vmatpush.xpose.msra.mxu0 %v377
        %395 = vmatmul.f32.gmra.mxu0 %v375
        %v396 = vpop.f32.mrf.mxu0
        %v397 = vadd.f32 0.0, %v396
        %398 = vdwg.mxu0
        %v399 = vsel %vm373, %v397, -inf
        %400 = vmax.xlane.f32.xlu0 %v399
        %v401 = vpop.xlane.xlu0 %400
        %v402 = vsub.f32 %v397, %v401
        %v403 = vmul.f32 %v402, 1.442695
        %v404 = vpow.pop %v403
        %v405 = vsel %vm373, %v404, 0.0
        %406 = vadd.xlane.f32.xlu0 %v405
        %v407 = vpop.xlane.xlu0 %406
        %v408 = vrcp.pop %v407
        %v409 = vmul.f32 %v404, %v408
        %410 = vrot.lane.b32.xlu0 %v360, 64
        %v411 = vpop.permute.xlu0 %410
        %v414 = vsel %vm373, %v409, 0
        %416 = vmatpush.msra.mxu0 0.0
        %417 = vmatpush.msra.mxu0 0.0
        %418 = vmatpush.msra.mxu0 0.0
        %419 = vmatpush.msra.mxu0 0.0
        %420 = vmatpush.msra.mxu0 0.0
        %421 = vmatpush.msra.mxu0 0.0
        %422 = vmatpush.msra.mxu0 0.0
        %423 = vmatpush.msra.mxu0 0.0
        %424 = vmatpush.msra.mxu0 0.0
        %425 = vmatpush.msra.mxu0 0.0
        %426 = vmatpush.msra.mxu0 0.0
        %427 = vmatpush.msra.mxu0 0.0
        %428 = vmatpush.msra.mxu0 0.0
        %429 = vmatpush.msra.mxu0 0.0
        %430 = vmatpush.msra.mxu0 0.0
        %431 = vmatpush.msra.mxu0 %v411
        %432 = vmatmul.f32.gmra.mxu0 %v414
        %v433 = vpop.f32.mrf.mxu0
        %v434 = vadd.f32 0.0, %v433
        %435 = vdwg.mxu0
        %436 = vrot.lane.b32.xlu0 %v369, 120
        %v437 = vpop.permute.xlu0 %436
        %438 = vrot.lane.b32.xlu0 %v360, 88
        %v439 = vpop.permute.xlu0 %438
        %v440 = vsel %vm373, %v437, 0
        %v442 = vsel %vm373, %v439, 0
        %444 = vmatpush.xpose.msra.mxu0 0.0
        %445 = vmatpush.xpose.msra.mxu0 0.0
        %446 = vmatpush.xpose.msra.mxu0 0.0
        %447 = vmatpush.xpose.msra.mxu0 0.0
        %448 = vmatpush.xpose.msra.mxu0 0.0
        %449 = vmatpush.xpose.msra.mxu0 0.0
        %450 = vmatpush.xpose.msra.mxu0 0.0
        %451 = vmatpush.xpose.msra.mxu0 0.0
        %452 = vmatpush.xpose.msra.mxu0 0.0
        %453 = vmatpush.xpose.msra.mxu0 0.0
        %454 = vmatpush.xpose.msra.mxu0 0.0
        %455 = vmatpush.xpose.msra.mxu0 0.0
        %456 = vmatpush.xpose.msra.mxu0 0.0
        %457 = vmatpush.xpose.msra.mxu0 0.0
        %458 = vmatpush.xpose.msra.mxu0 0.0
        %459 = vmatpush.xpose.msra.mxu0 %v442
        %460 = vmatmul.f32.gmra.mxu0 %v440
        %v461 = vpop.f32.mrf.mxu0
        %v462 = vadd.f32 0.0, %v461
        %463 = vdwg.mxu0
        %v464 = vsel %vm373, %v462, -inf
        %465 = vmax.xlane.f32.xlu0 %v464
        %v466 = vpop.xlane.xlu0 %465
        %v467 = vsub.f32 %v462, %v466
        %v468 = vmul.f32 %v467, 1.442695
        %v469 = vpow.pop %v468
        %v470 = vsel %vm373, %v469, 0.0
        %471 = vadd.xlane.f32.xlu0 %v470
        %v472 = vpop.xlane.xlu0 %471
        %v473 = vrcp.pop %v472
        %v474 = vmul.f32 %v469, %v473
        %475 = vrot.lane.b32.xlu0 %v360, 56
        %v476 = vpop.permute.xlu0 %475
        %v479 = vsel %vm373, %v474, 0
        %481 = vmatpush.msra.mxu0 0.0
        %482 = vmatpush.msra.mxu0 0.0
        %483 = vmatpush.msra.mxu0 0.0
        %484 = vmatpush.msra.mxu0 0.0
        %485 = vmatpush.msra.mxu0 0.0
        %486 = vmatpush.msra.mxu0 0.0
        %487 = vmatpush.msra.mxu0 0.0
        %488 = vmatpush.msra.mxu0 0.0
        %489 = vmatpush.msra.mxu0 0.0
        %490 = vmatpush.msra.mxu0 0.0
        %491 = vmatpush.msra.mxu0 0.0
        %492 = vmatpush.msra.mxu0 0.0
        %493 = vmatpush.msra.mxu0 0.0
        %494 = vmatpush.msra.mxu0 0.0
        %495 = vmatpush.msra.mxu0 0.0
        %496 = vmatpush.msra.mxu0 %v476
        %497 = vmatmul.f32.gmra.mxu0 %v479
        %v498 = vpop.f32.mrf.mxu0
        %v499 = vadd.f32 0.0, %v498
        %500 = vdwg.mxu0
        %v502 = vsel %vm373, %v499, 0
        %504 = vmatpush.msra.mxu0 0.0
        %505 = vmatpush.msra.mxu0 0.0
        %506 = vmatpush.msra.mxu0 0.0
        %507 = vmatpush.msra.mxu0 0.0
        %508 = vmatpush.msra.mxu0 0.0
        %509 = vmatpush.msra.mxu0 0.0
        %510 = vmatpush.msra.mxu0 0.0
        %511 = vmatpush.msra.mxu0 0.0
        %512 = vmatpush.msra.mxu0 0.0
        %513 = vmatpush.msra.mxu0 0.0
        %514 = vmatpush.msra.mxu0 0.0
        %515 = vmatpush.msra.mxu0 0.0
        %516 = vmatpush.msra.mxu0 0.0
        %517 = vmatpush.msra.mxu0 0.0
        %518 = vmatpush.msra.mxu0 0.0
        %519 = vmatpush.msra.mxu0 %v363
        %520 = vmatmul.f32.gmra.mxu0 %v502
        %v521 = vpop.f32.mrf.mxu0
        %v522 = vadd.f32 0.0, %v521
        %523 = vdwg.mxu0
        %v525 = vsel %vm373, %v434, 0
        %527 = vmatpush.msra.mxu0 0.0
        %528 = vmatpush.msra.mxu0 0.0
        %529 = vmatpush.msra.mxu0 0.0
        %530 = vmatpush.msra.mxu0 0.0
        %531 = vmatpush.msra.mxu0 0.0
        %532 = vmatpush.msra.mxu0 0.0
        %533 = vmatpush.msra.mxu0 0.0
        %534 = vmatpush.msra.mxu0 0.0
        %535 = vmatpush.msra.mxu0 0.0
        %536 = vmatpush.msra.mxu0 0.0
        %537 = vmatpush.msra.mxu0 0.0
        %538 = vmatpush.msra.mxu0 0.0
        %539 = vmatpush.msra.mxu0 0.0
        %540 = vmatpush.msra.mxu0 0.0
        %541 = vmatpush.msra.mxu0 0.0
        %542 = vmatpush.msra.mxu0 %v362
        %543 = vmatmul.f32.gmra.mxu0 %v525
        %v544 = vpop.f32.mrf.mxu0
        %v545 = vadd.f32 %v522, %v544
        %546 = vdwg.mxu0
        %547 = vrot.lane.b32.xlu0 %v369, 112
        %v548 = vpop.permute.xlu0 %547
        %549 = vrot.lane.b32.xlu0 %v360, 80
        %v550 = vpop.permute.xlu0 %549
        %v551 = vsel %vm373, %v548, 0
        %v553 = vsel %vm373, %v550, 0
        %555 = vmatpush.xpose.msra.mxu0 0.0
        %556 = vmatpush.xpose.msra.mxu0 0.0
        %557 = vmatpush.xpose.msra.mxu0 0.0
        %558 = vmatpush.xpose.msra.mxu0 0.0
        %559 = vmatpush.xpose.msra.mxu0 0.0
        %560 = vmatpush.xpose.msra.mxu0 0.0
        %561 = vmatpush.xpose.msra.mxu0 0.0
        %562 = vmatpush.xpose.msra.mxu0 0.0
        %563 = vmatpush.xpose.msra.mxu0 0.0
        %564 = vmatpush.xpose.msra.mxu0 0.0
        %565 = vmatpush.xpose.msra.mxu0 0.0
        %566 = vmatpush.xpose.msra.mxu0 0.0
        %567 = vmatpush.xpose.msra.mxu0 0.0
        %568 = vmatpush.xpose.msra.mxu0 0.0
        %569 = vmatpush.xpose.msra.mxu0 0.0
        %570 = vmatpush.xpose.msra.mxu0 %v553
        %571 = vmatmul.f32.gmra.mxu0 %v551
        %v572 = vpop.f32.mrf.mxu0
        %v573 = vadd.f32 0.0, %v572
        %574 = vdwg.mxu0
        %v575 = vsel %vm373, %v573, -inf
        %576 = vmax.xlane.f32.xlu0 %v575
        %v577 = vpop.xlane.xlu0 %576
        %v578 = vsub.f32 %v573, %v577
        %v579 = vmul.f32 %v578, 1.442695
        %v580 = vpow.pop %v579
        %v581 = vsel %vm373, %v580, 0.0
        %582 = vadd.xlane.f32.xlu0 %v581
        %v583 = vpop.xlane.xlu0 %582
        %v584 = vrcp.pop %v583
        %v585 = vmul.f32 %v580, %v584
        %586 = vrot.lane.b32.xlu0 %v360, 48
        %v587 = vpop.permute.xlu0 %586
        %v590 = vsel %vm373, %v585, 0
        %592 = vmatpush.msra.mxu0 0.0
        %593 = vmatpush.msra.mxu0 0.0
        %594 = vmatpush.msra.mxu0 0.0
        %595 = vmatpush.msra.mxu0 0.0
        %596 = vmatpush.msra.mxu0 0.0
        %597 = vmatpush.msra.mxu0 0.0
        %598 = vmatpush.msra.mxu0 0.0
        %599 = vmatpush.msra.mxu0 0.0
        %600 = vmatpush.msra.mxu0 0.0
        %601 = vmatpush.msra.mxu0 0.0
        %602 = vmatpush.msra.mxu0 0.0
        %603 = vmatpush.msra.mxu0 0.0
        %604 = vmatpush.msra.mxu0 0.0
        %605 = vmatpush.msra.mxu0 0.0
        %606 = vmatpush.msra.mxu0 0.0
        %607 = vmatpush.msra.mxu0 %v587
        %608 = vmatmul.f32.gmra.mxu0 %v590
        %v609 = vpop.f32.mrf.mxu0
        %v610 = vadd.f32 0.0, %v609
        %611 = vdwg.mxu0
        %v613 = vsel %vm373, %v610, 0
        %615 = vmatpush.msra.mxu0 0.0
        %616 = vmatpush.msra.mxu0 0.0
        %617 = vmatpush.msra.mxu0 0.0
        %618 = vmatpush.msra.mxu0 0.0
        %619 = vmatpush.msra.mxu0 0.0
        %620 = vmatpush.msra.mxu0 0.0
        %621 = vmatpush.msra.mxu0 0.0
        %622 = vmatpush.msra.mxu0 0.0
        %623 = vmatpush.msra.mxu0 0.0
        %624 = vmatpush.msra.mxu0 0.0
        %625 = vmatpush.msra.mxu0 0.0
        %626 = vmatpush.msra.mxu0 0.0
        %627 = vmatpush.msra.mxu0 0.0
        %628 = vmatpush.msra.mxu0 0.0
        %629 = vmatpush.msra.mxu0 0.0
        %630 = vmatpush.msra.mxu0 %v364
        %631 = vmatmul.f32.gmra.mxu0 %v613
        %v632 = vpop.f32.mrf.mxu0
        %v633 = vadd.f32 0.0, %v632
        %634 = vdwg.mxu0
        %v635 = vadd.f32 %v545, %v633
        %636 = vrot.lane.b32.xlu0 %v369, 104
        %v637 = vpop.permute.xlu0 %636
        %638 = vrot.lane.b32.xlu0 %v360, 72
        %v639 = vpop.permute.xlu0 %638
        %v640 = vsel %vm373, %v637, 0
        %v642 = vsel %vm373, %v639, 0
        %644 = vmatpush.xpose.msra.mxu0 0.0
        %645 = vmatpush.xpose.msra.mxu0 0.0
        %646 = vmatpush.xpose.msra.mxu0 0.0
        %647 = vmatpush.xpose.msra.mxu0 0.0
        %648 = vmatpush.xpose.msra.mxu0 0.0
        %649 = vmatpush.xpose.msra.mxu0 0.0
        %650 = vmatpush.xpose.msra.mxu0 0.0
        %651 = vmatpush.xpose.msra.mxu0 0.0
        %652 = vmatpush.xpose.msra.mxu0 0.0
        %653 = vmatpush.xpose.msra.mxu0 0.0
        %654 = vmatpush.xpose.msra.mxu0 0.0
        %655 = vmatpush.xpose.msra.mxu0 0.0
        %656 = vmatpush.xpose.msra.mxu0 0.0
        %657 = vmatpush.xpose.msra.mxu0 0.0
        %658 = vmatpush.xpose.msra.mxu0 0.0
        %659 = vmatpush.xpose.msra.mxu0 %v642
        %660 = vmatmul.f32.gmra.mxu0 %v640
        %v661 = vpop.f32.mrf.mxu0
        %v662 = vadd.f32 0.0, %v661
        %663 = vdwg.mxu0
        %v664 = vsel %vm373, %v662, -inf
        %665 = vmax.xlane.f32.xlu0 %v664
        %v666 = vpop.xlane.xlu0 %665
        %v667 = vsub.f32 %v662, %v666
        %v668 = vmul.f32 %v667, 1.442695
        %v669 = vpow.pop %v668
        %v670 = vsel %vm373, %v669, 0.0
        %671 = vadd.xlane.f32.xlu0 %v670
        %v672 = vpop.xlane.xlu0 %671
        %v673 = vrcp.pop %v672
        %v674 = vmul.f32 %v669, %v673
        %675 = vrot.lane.b32.xlu0 %v360, 40
        %v676 = vpop.permute.xlu0 %675
        %v679 = vsel %vm373, %v674, 0
        %681 = vmatpush.msra.mxu0 0.0
        %682 = vmatpush.msra.mxu0 0.0
        %683 = vmatpush.msra.mxu0 0.0
        %684 = vmatpush.msra.mxu0 0.0
        %685 = vmatpush.msra.mxu0 0.0
        %686 = vmatpush.msra.mxu0 0.0
        %687 = vmatpush.msra.mxu0 0.0
        %688 = vmatpush.msra.mxu0 0.0
        %689 = vmatpush.msra.mxu0 0.0
        %690 = vmatpush.msra.mxu0 0.0
        %691 = vmatpush.msra.mxu0 0.0
        %692 = vmatpush.msra.mxu0 0.0
        %693 = vmatpush.msra.mxu0 0.0
        %694 = vmatpush.msra.mxu0 0.0
        %695 = vmatpush.msra.mxu0 0.0
        %696 = vmatpush.msra.mxu0 %v676
        %697 = vmatmul.f32.gmra.mxu0 %v679
        %v698 = vpop.f32.mrf.mxu0
        %v699 = vadd.f32 0.0, %v698
        %700 = vdwg.mxu0
        %v702 = vsel %vm373, %v699, 0
        %704 = vmatpush.msra.mxu0 0.0
        %705 = vmatpush.msra.mxu0 0.0
        %706 = vmatpush.msra.mxu0 0.0
        %707 = vmatpush.msra.mxu0 0.0
        %708 = vmatpush.msra.mxu0 0.0
        %709 = vmatpush.msra.mxu0 0.0
        %710 = vmatpush.msra.mxu0 0.0
        %711 = vmatpush.msra.mxu0 0.0
        %712 = vmatpush.msra.mxu0 0.0
        %713 = vmatpush.msra.mxu0 0.0
        %714 = vmatpush.msra.mxu0 0.0
        %715 = vmatpush.msra.mxu0 0.0
        %716 = vmatpush.msra.mxu0 0.0
        %717 = vmatpush.msra.mxu0 0.0
        %718 = vmatpush.msra.mxu0 0.0
        %719 = vmatpush.msra.mxu0 %v365
        %720 = vmatmul.f32.gmra.mxu0 %v702
        %v721 = vpop.f32.mrf.mxu0
        %v722 = vadd.f32 0.0, %v721
        %723 = vdwg.mxu0
        %v724 = vadd.f32 %v635, %v722
        %v726 = vperm.slane %v366, 0
        %v728 = vadd.f32 %v724, %v726
        %v729 = vadd.f32 %v329, %v728
        %v730 = vsel %vm338, %v729, 0.0
        %731 = vadd.xlane.f32.xlu0 %v730
        %v732 = vpop.xlane.xlu0 %731
        %v733 = vrcp.pop 32.0
        %v734 = vmul.f32 32.0, %v733
        %v735 = vsub.f32 1.0, %v734
        %v736 = vmul.f32 %v733, %v735
        %v737 = vadd.f32 %v733, %v736
        %vm738 = vweird.f32 %v733
        %v739 = vsel %vm738, %v733, %v737
        %v740 = vmul.f32 %v732, %v739
        %v741 = vsub.f32 %v729, %v740
        %v742 = vmul.f32 %v741, %v741
        %v743 = vsel %vm338, %v742, 0.0
        %744 = vadd.xlane.f32.xlu0 %v743
        %v745 = vpop.xlane.xlu0 %744
        %v746 = vmul.f32 %v745, %v739
        %v747 = vadd.f32 %v746, 1e-05
        %v748 = vrsqrt.pop %v747
        %v749 = vmul.f32 %v748, %v747
        %v750 = vmul.f32 %v749, %v748
        %v751 = vmul.f32 0.5, %v750
        %v752 = vsub.f32 1.5, %v751
        %v753 = vmul.f32 %v748, %v752
        %vm754 = vweird.f32 %v747
        %vm755 = vweird.f32 %v748
        %vm756 = vmor %vm754, %vm755
        %v757 = vsel %vm756, %v748, %v753
        %v758 = vmul.f32 %v741, %v757
        %v760 = vperm.slane %v367, 0
        %v762 = vmul.f32 %v758, %v760
        %v764 = vperm.slane %v368, 0
        %v766 = vadd.f32 %v762, %v764
        %767 = vst.msk [vmem:[%s328] sm:$0xff] %vm338, %v766
        %s768 = sand.u32 %s185, 1
        %s769 = scalar_lea.sflag [#allocation4], %s768
        %s770 = sand.u32 %s185, 1
        %s771 = smul.addr %s770, 8
        %s772 = scalar_lea.vmem [#allocation8], %s771
        // Predicated region
        $region61: #{tpu_custom_call.1} parent=47 // pred_check
          %p773 = pneg %p195
        $region62: #{tpu_custom_call.1} parent=47 // pred_check_branch
          %775 = sbr.rel (%p773) target = $region64
        $region63: #{tpu_custom_call.1} parent=47 // pred_region
          %777 = vsyncadd %s769, 0
          %s778 = smul.addr %s25, 8
          %s779 = scalar_lea.hbm %s7, %s778
          %s781 = sshll.u32 %s772, 4
          %s782 = int_to_ptr.vmem [resolvable:$true] %s781
          %s783 = sshll.u32 %s779, 4
          %s784 = int_to_ptr.hbm [resolvable:$true] %s783
          %786 = dma.vmem_to_hbm [thread:$0]  %s782, 128, %s784, %s769
        $region64: #{tpu_custom_call.1} parent=47 // pred_fallthru
          _
      $region48: #{tpu_custom_call.1} parent=5 // pred_fallthru
        _
      %p787 = scmp.le.s32.totalorder 2, %s20
      // Predicated region
      $region65: #{tpu_custom_call.1} parent=5 // pred_check
        %p788 = pneg %p787
      $region66: #{tpu_custom_call.1} parent=5 // pred_check_branch
        %790 = sbr.rel (%p788) target = $region68
      $region67: #{tpu_custom_call.1} parent=5 // pred_region
        %s791 = ssub.s32 %s20, 2
        // Predicated region
        $region69: #{tpu_custom_call.1} parent=67 // pred_check
          %p792 = pneg %p201
        $region70: #{tpu_custom_call.1} parent=67 // pred_check_branch
          %794 = sbr.rel (%p792) target = $region72
        $region71: #{tpu_custom_call.1} parent=67 // pred_region
          %s795 = sand.u32 %s186, 1
          %s796 = scalar_lea.sflag [#allocation4], %s795
          %s797 = sand.u32 %s186, 1
          %s798 = smul.addr %s797, 8
          %s799 = scalar_lea.vmem [#allocation8], %s798
          %801 = dma.done %s796, 128
        $region72: #{tpu_custom_call.1} parent=67 // pred_fallthru
          _
      $region68: #{tpu_custom_call.1} parent=5 // pred_fallthru
        _
    $region6: #{tpu_custom_call.1} parent=1 // loop_footer
      %s24 = sadd.s32 1, %s20
    $region7: #{tpu_custom_call.1} parent=1 // loop_footer_branch
      %19 = sbr.rel target = $region3
    $region8: #{tpu_custom_call.1} parent=1 // loop_exit
      _
    %802 = vsyncpa [#allocation3], 1
    %s803 = scalar_lea.sflag [#allocation3], 1
    %804 = vsyncpa %s803, 1
    %805 = vsyncpa [#allocation6], 1
    %806 = vsyncpa [#allocation4], 1
    %s807 = scalar_lea.sflag [#allocation4], 1
    %808 = vsyncpa %s807, 1

</llo_original>
